<compile_context>
chip_gen: v6e
topology: v6e:2x2x1
jax: 0.10.0
libtpu: 0.0.40
codegen_flags: <defaults>
</compile_context>

<pallas_src>
import math

import jax
import jax.numpy as jnp
from jax.experimental import pallas as pl
from jax.experimental.pallas import tpu as pltpu

# ----- ring constants (identical for every ring in the bank) ------------------
Q_FACTOR = 15000.0
COUPLING = 0.5
KAPPA = min(max(COUPLING, 0.1), 0.9)          # torch.clamp(coupling_tuning, 0.1, 0.9)
T_COUP = math.sqrt(1.0 - KAPPA ** 2)          # sqrt(1 - kappa^2)
ALPHA = 1.0 - math.pi / Q_FACTOR              # round-trip loss
KERR_COEFF = 2.7e-18                          # Kerr coefficient
N_GROUP = 4.2
RING_RADIUS = 5e-6

_AT = ALPHA * T_COUP
_K_NUM = KAPPA * KAPPA * ALPHA                # kappa^2 * alpha
_DENOM_CONST = 1.0 + _AT * _AT                # 1 + (alpha*t)^2
_TWO_AT = 2.0 * _AT

LANE = 128
MAX_TW = 512                                  # target lane-tile (512 lanes ~85% HBM roofline)
MAX_TB = 8                                    # batch tile


def _round_up(x, m):
    return ((x + m - 1) // m) * m


def mrr_weight_bank_kernel(cos_ps_ref, sin_ps_ref, x_ref, cos_det_ref, sin_det_ref,
                           out_ref):
    """cos_ps/sin_ps: (I,) f32 in SMEM (per-input Kerr phase, precomputed),
    x_ref: (TB, I, TW) f32, cos_det/sin_det: (O, I, TW) f32, out_ref: (TB, O, TW) f32."""
    n_inputs = x_ref.shape[1]
    acc = jnp.zeros(out_ref.shape, jnp.float32)

    # Unrolled accumulator loop over the (small) input index: live data stays at
    # (TB, O, TW); drop_i is recomputed per input from static cos/sin tables + 2 FMAs
    # (angle addition) instead of a vector cos.
    for i in range(n_inputs):
        cp = cos_ps_ref[i]                                   # scalar cos(phase_shift_i)
        sp = sin_ps_ref[i]                                   # scalar sin(phase_shift_i)
        cos_tot = cos_det_ref[:, i, :] * cp - sin_det_ref[:, i, :] * sp   # (O, TW)
        denom = _DENOM_CONST - _TWO_AT * cos_tot                          # (O, TW)
        drop_i = _K_NUM / denom                                           # (O, TW)
        x_i = x_ref[:, i, :]                                              # (TB, TW)
        acc = acc + drop_i[None, :, :] * x_i[:, None, :]                  # (TB, O, TW)

    out_ref[...] = acc


def make_detuning(n_inputs, n_outputs, n_wavelengths,
                  wavelength_range=(1.53e-6, 1.57e-6)):
    """Deterministic ring-geometry setup (matches MRRWeightBank.__init__)."""
    wl_min, wl_max = wavelength_range
    wavelengths = jnp.linspace(wl_min, wl_max, n_wavelengths, dtype=jnp.float32)  # (W,)
    i_idx = jnp.arange(n_outputs, dtype=jnp.float32)[:, None]                     # (O,1)
    j_idx = jnp.arange(n_inputs, dtype=jnp.float32)[None, :]                      # (1,I)
    flat = i_idx * n_inputs + j_idx                                                # (O,I)
    center_wl = wl_min + (wl_max - wl_min) * flat / (n_inputs * n_outputs)         # (O,I)
    circumference = 2.0 * math.pi * RING_RADIUS
    fsr = center_wl ** 2 / (N_GROUP * circumference)                               # (O,I)
    delta = wavelengths[None, None, :] - center_wl[:, :, None]                     # (O,I,W)
    detuning = 2.0 * math.pi * delta / fsr[:, :, None]                             # (O,I,W)
    return detuning.astype(jnp.float32)


@jax.jit
def mrr_weight_bank(x, cos_det, sin_det):
    """x: (B, I, W) f32; cos_det/sin_det: (O, I, W) f32 static geometry tables."""
    B, I, W = x.shape
    O = cos_det.shape[0]

    # Kerr phase per input waveguide (hoisted global reduction; tiny (I,) vectors).
    # NOTE: phase_shift ~ 1e-19 rad vs detuning O(1-10) rad, so it is numerically
    # invisible in f32 -- kept anyway to match the PyTorch module exactly.
    mean_power = jnp.mean(x * x, axis=(0, 2))                       # (I,)
    phase_shift = (KERR_COEFF * 0.1) * mean_power                   # (I,)
    cos_ps = jnp.cos(phase_shift).astype(jnp.float32)
    sin_ps = jnp.sin(phase_shift).astype(jnp.float32)

    # Lane-dense tiling: pad wavelength axis to a multiple of 128 (unmasked vst),
    # tile batch by at most 8 rows.
    tw = min(MAX_TW, _round_up(W, LANE))
    w_pad = _round_up(W, tw)
    tb = B if B <= MAX_TB else MAX_TB
    b_pad = _round_up(B, tb)

    x_p = jnp.pad(x, ((0, b_pad - B), (0, 0), (0, w_pad - W)))
    cd_p = jnp.pad(cos_det, ((0, 0), (0, 0), (0, w_pad - W)))
    sd_p = jnp.pad(sin_det, ((0, 0), (0, 0), (0, w_pad - W)))
    # Padded wavelength columns give cos_tot = 0 -> finite drop, multiplied by x = 0,
    # so the padded region of the output is exactly zero and sliced away below.

    grid = (b_pad // tb, w_pad // tw)

    out = pl.pallas_call(
        mrr_weight_bank_kernel,
        out_shape=jax.ShapeDtypeStruct((b_pad, O, w_pad), jnp.float32),
        grid=grid,
        in_specs=[
            pl.BlockSpec(memory_space=pltpu.MemorySpace.SMEM),          # cos_ps (I,)
            pl.BlockSpec(memory_space=pltpu.MemorySpace.SMEM),          # sin_ps (I,)
            pl.BlockSpec((tb, I, tw), lambda b, w: (b, 0, w)),          # x
            pl.BlockSpec((O, I, tw), lambda b, w: (0, 0, w)),           # cos(detuning)
            pl.BlockSpec((O, I, tw), lambda b, w: (0, 0, w)),           # sin(detuning)
        ],
        out_specs=pl.BlockSpec((tb, O, tw), lambda b, w: (b, 0, w)),
        compiler_params=pltpu.CompilerParams(
            dimension_semantics=("parallel", "parallel")),
    )(cos_ps, sin_ps, x_p, cd_p, sd_p)

    return out[:B, :, :W]


def mrr_weight_bank_ref(x, detuning):
    """Pure-JAX reference (same math as the PyTorch module) for a correctness check."""
    mean_power = jnp.mean(x * x, axis=(0, 2), keepdims=True)       # (1, I, 1)
    phase_shift = (KERR_COEFF * mean_power) * 0.1
    total_phase = detuning + phase_shift
    at = ALPHA * T_COUP
    denom_sq = 1.0 - 2.0 * at * jnp.cos(total_phase) + at * at
    drop = (KAPPA * KAPPA * ALPHA) / denom_sq
    return jnp.einsum("oiw,biw->bow", drop, x)


if __name__ == "__main__":
    batch, n_inputs, n_outputs, n_wavelengths = 2, 4, 3, 16

    key = jax.random.PRNGKey(0)
    x = jax.random.normal(key, (batch, n_inputs, n_wavelengths), dtype=jnp.float32)

    detuning = make_detuning(n_inputs, n_outputs, n_wavelengths)
    # Static geometry tables -- computed once, reused for every forward call.
    cos_det = jnp.cos(detuning).astype(jnp.float32)
    sin_det = jnp.sin(detuning).astype(jnp.float32)

    out = mrr_weight_bank(x, cos_det, sin_det)
    out = jax.block_until_ready(out)

    ref = mrr_weight_bank_ref(x, detuning)
    assert out.shape == (batch, n_outputs, n_wavelengths)
    assert jnp.allclose(out, ref, rtol=1e-4, atol=1e-5), "mismatch vs reference"

    print("KERNEL_OK")
</pallas_src>

<mosaic_0001>
module attributes {stable_mosaic.version = 11 : i64} {
  func.func @mrr_weight_bank_kernel(%arg0: i32, %arg1: i32, %arg2: memref<4xf32, #tpu.memory_space<smem>>, %arg3: memref<4xf32, #tpu.memory_space<smem>>, %arg4: memref<2x4x128xf32, #tpu.memory_space<vmem>>, %arg5: memref<3x4x128xf32, #tpu.memory_space<vmem>>, %arg6: memref<3x4x128xf32, #tpu.memory_space<vmem>>, %arg7: memref<2x3x128xf32, #tpu.memory_space<vmem>>) attributes {dimension_semantics = [#tpu.dimension_semantics<parallel>, #tpu.dimension_semantics<parallel>], iteration_bounds = array<i64: 1, 1>, scalar_prefetch = 0 : i64, scratch_operands = 0 : i64, tpu.core_type = #tpu.core_type<tc>, window_params = [{transform_indices = @transform_0, window_bounds = array<i64: 4>}, {transform_indices = @transform_1, window_bounds = array<i64: 4>}, {transform_indices = @transform_2, window_bounds = array<i64: 2, 4, 128>}, {transform_indices = @transform_3, window_bounds = array<i64: 3, 4, 128>}, {transform_indices = @transform_4, window_bounds = array<i64: 3, 4, 128>}, {transform_indices = @transform_5, window_bounds = array<i64: 2, 3, 128>}]} {
    %cst = arith.constant 0.000000e+00 : f32
    %0 = vector.broadcast %cst : f32 to vector<2x3x128xf32>
    %c0 = arith.constant 0 : index
    %1 = memref.load %arg2[%c0] : memref<4xf32, #tpu.memory_space<smem>>
    %c0_0 = arith.constant 0 : index
    %2 = memref.load %arg3[%c0_0] : memref<4xf32, #tpu.memory_space<smem>>
    %c0_1 = arith.constant 0 : index
    %c0_2 = arith.constant 0 : index
    %c0_3 = arith.constant 0 : index
    %3 = vector.load %arg5[%c0_1, %c0_2, %c0_3] : memref<3x4x128xf32, #tpu.memory_space<vmem>>, vector<3x1x128xf32>
    %4 = vector.shape_cast %3 : vector<3x1x128xf32> to vector<3x128xf32>
    %5 = vector.broadcast %1 : f32 to vector<3x128xf32>
    %6 = arith.mulf %4, %5 : vector<3x128xf32>
    %c0_4 = arith.constant 0 : index
    %c0_5 = arith.constant 0 : index
    %c0_6 = arith.constant 0 : index
    %7 = vector.load %arg6[%c0_4, %c0_5, %c0_6] : memref<3x4x128xf32, #tpu.memory_space<vmem>>, vector<3x1x128xf32>
    %8 = vector.shape_cast %7 : vector<3x1x128xf32> to vector<3x128xf32>
    %9 = vector.broadcast %2 : f32 to vector<3x128xf32>
    %10 = arith.mulf %8, %9 : vector<3x128xf32>
    %11 = arith.subf %6, %10 : vector<3x128xf32>
    %cst_7 = arith.constant 1.73168802 : f32
    %12 = vector.broadcast %cst_7 : f32 to vector<3x128xf32>
    %13 = arith.mulf %12, %11 : vector<3x128xf32>
    %cst_8 = arith.constant 1.74968588 : f32
    %14 = vector.broadcast %cst_8 : f32 to vector<3x128xf32>
    %15 = arith.subf %14, %13 : vector<3x128xf32>
    %cst_9 = arith.constant 0.249947637 : f32
    %16 = vector.broadcast %cst_9 : f32 to vector<3x128xf32>
    %17 = arith.divf %16, %15 : vector<3x128xf32>
    %c0_10 = arith.constant 0 : index
    %c0_11 = arith.constant 0 : index
    %c0_12 = arith.constant 0 : index
    %18 = vector.load %arg4[%c0_10, %c0_11, %c0_12] : memref<2x4x128xf32, #tpu.memory_space<vmem>>, vector<2x1x128xf32>
    %19 = vector.shape_cast %18 : vector<2x1x128xf32> to vector<2x128xf32>
    %20 = vector.shape_cast %17 : vector<3x128xf32> to vector<1x3x128xf32>
    %21 = vector.shape_cast %19 : vector<2x128xf32> to vector<2x1x128xf32>
    %22 = vector.broadcast %20 : vector<1x3x128xf32> to vector<2x3x128xf32>
    %23 = vector.broadcast %21 : vector<2x1x128xf32> to vector<2x3x128xf32>
    %24 = arith.mulf %22, %23 : vector<2x3x128xf32>
    %25 = arith.addf %0, %24 : vector<2x3x128xf32>
    %c1 = arith.constant 1 : index
    %26 = memref.load %arg2[%c1] : memref<4xf32, #tpu.memory_space<smem>>
    %c1_13 = arith.constant 1 : index
    %27 = memref.load %arg3[%c1_13] : memref<4xf32, #tpu.memory_space<smem>>
    %c0_14 = arith.constant 0 : index
    %c1_15 = arith.constant 1 : index
    %c0_16 = arith.constant 0 : index
    %28 = vector.load %arg5[%c0_14, %c1_15, %c0_16] : memref<3x4x128xf32, #tpu.memory_space<vmem>>, vector<3x1x128xf32>
    %29 = vector.shape_cast %28 : vector<3x1x128xf32> to vector<3x128xf32>
    %30 = vector.broadcast %26 : f32 to vector<3x128xf32>
    %31 = arith.mulf %29, %30 : vector<3x128xf32>
    %c0_17 = arith.constant 0 : index
    %c1_18 = arith.constant 1 : index
    %c0_19 = arith.constant 0 : index
    %32 = vector.load %arg6[%c0_17, %c1_18, %c0_19] : memref<3x4x128xf32, #tpu.memory_space<vmem>>, vector<3x1x128xf32>
    %33 = vector.shape_cast %32 : vector<3x1x128xf32> to vector<3x128xf32>
    %34 = vector.broadcast %27 : f32 to vector<3x128xf32>
    %35 = arith.mulf %33, %34 : vector<3x128xf32>
    %36 = arith.subf %31, %35 : vector<3x128xf32>
    %cst_20 = arith.constant 1.73168802 : f32
    %37 = vector.broadcast %cst_20 : f32 to vector<3x128xf32>
    %38 = arith.mulf %37, %36 : vector<3x128xf32>
    %cst_21 = arith.constant 1.74968588 : f32
    %39 = vector.broadcast %cst_21 : f32 to vector<3x128xf32>
    %40 = arith.subf %39, %38 : vector<3x128xf32>
    %cst_22 = arith.constant 0.249947637 : f32
    %41 = vector.broadcast %cst_22 : f32 to vector<3x128xf32>
    %42 = arith.divf %41, %40 : vector<3x128xf32>
    %c0_23 = arith.constant 0 : index
    %c1_24 = arith.constant 1 : index
    %c0_25 = arith.constant 0 : index
    %43 = vector.load %arg4[%c0_23, %c1_24, %c0_25] : memref<2x4x128xf32, #tpu.memory_space<vmem>>, vector<2x1x128xf32>
    %44 = vector.shape_cast %43 : vector<2x1x128xf32> to vector<2x128xf32>
    %45 = vector.shape_cast %42 : vector<3x128xf32> to vector<1x3x128xf32>
    %46 = vector.shape_cast %44 : vector<2x128xf32> to vector<2x1x128xf32>
    %47 = vector.broadcast %45 : vector<1x3x128xf32> to vector<2x3x128xf32>
    %48 = vector.broadcast %46 : vector<2x1x128xf32> to vector<2x3x128xf32>
    %49 = arith.mulf %47, %48 : vector<2x3x128xf32>
    %50 = arith.addf %25, %49 : vector<2x3x128xf32>
    %c2 = arith.constant 2 : index
    %51 = memref.load %arg2[%c2] : memref<4xf32, #tpu.memory_space<smem>>
    %c2_26 = arith.constant 2 : index
    %52 = memref.load %arg3[%c2_26] : memref<4xf32, #tpu.memory_space<smem>>
    %c0_27 = arith.constant 0 : index
    %c2_28 = arith.constant 2 : index
    %c0_29 = arith.constant 0 : index
    %53 = vector.load %arg5[%c0_27, %c2_28, %c0_29] : memref<3x4x128xf32, #tpu.memory_space<vmem>>, vector<3x1x128xf32>
    %54 = vector.shape_cast %53 : vector<3x1x128xf32> to vector<3x128xf32>
    %55 = vector.broadcast %51 : f32 to vector<3x128xf32>
    %56 = arith.mulf %54, %55 : vector<3x128xf32>
    %c0_30 = arith.constant 0 : index
    %c2_31 = arith.constant 2 : index
    %c0_32 = arith.constant 0 : index
    %57 = vector.load %arg6[%c0_30, %c2_31, %c0_32] : memref<3x4x128xf32, #tpu.memory_space<vmem>>, vector<3x1x128xf32>
    %58 = vector.shape_cast %57 : vector<3x1x128xf32> to vector<3x128xf32>
    %59 = vector.broadcast %52 : f32 to vector<3x128xf32>
    %60 = arith.mulf %58, %59 : vector<3x128xf32>
    %61 = arith.subf %56, %60 : vector<3x128xf32>
    %cst_33 = arith.constant 1.73168802 : f32
    %62 = vector.broadcast %cst_33 : f32 to vector<3x128xf32>
    %63 = arith.mulf %62, %61 : vector<3x128xf32>
    %cst_34 = arith.constant 1.74968588 : f32
    %64 = vector.broadcast %cst_34 : f32 to vector<3x128xf32>
    %65 = arith.subf %64, %63 : vector<3x128xf32>
    %cst_35 = arith.constant 0.249947637 : f32
    %66 = vector.broadcast %cst_35 : f32 to vector<3x128xf32>
    %67 = arith.divf %66, %65 : vector<3x128xf32>
    %c0_36 = arith.constant 0 : index
    %c2_37 = arith.constant 2 : index
    %c0_38 = arith.constant 0 : index
    %68 = vector.load %arg4[%c0_36, %c2_37, %c0_38] : memref<2x4x128xf32, #tpu.memory_space<vmem>>, vector<2x1x128xf32>
    %69 = vector.shape_cast %68 : vector<2x1x128xf32> to vector<2x128xf32>
    %70 = vector.shape_cast %67 : vector<3x128xf32> to vector<1x3x128xf32>
    %71 = vector.shape_cast %69 : vector<2x128xf32> to vector<2x1x128xf32>
    %72 = vector.broadcast %70 : vector<1x3x128xf32> to vector<2x3x128xf32>
    %73 = vector.broadcast %71 : vector<2x1x128xf32> to vector<2x3x128xf32>
    %74 = arith.mulf %72, %73 : vector<2x3x128xf32>
    %75 = arith.addf %50, %74 : vector<2x3x128xf32>
    %c3 = arith.constant 3 : index
    %76 = memref.load %arg2[%c3] : memref<4xf32, #tpu.memory_space<smem>>
    %c3_39 = arith.constant 3 : index
    %77 = memref.load %arg3[%c3_39] : memref<4xf32, #tpu.memory_space<smem>>
    %c0_40 = arith.constant 0 : index
    %c3_41 = arith.constant 3 : index
    %c0_42 = arith.constant 0 : index
    %78 = vector.load %arg5[%c0_40, %c3_41, %c0_42] : memref<3x4x128xf32, #tpu.memory_space<vmem>>, vector<3x1x128xf32>
    %79 = vector.shape_cast %78 : vector<3x1x128xf32> to vector<3x128xf32>
    %80 = vector.broadcast %76 : f32 to vector<3x128xf32>
    %81 = arith.mulf %79, %80 : vector<3x128xf32>
    %c0_43 = arith.constant 0 : index
    %c3_44 = arith.constant 3 : index
    %c0_45 = arith.constant 0 : index
    %82 = vector.load %arg6[%c0_43, %c3_44, %c0_45] : memref<3x4x128xf32, #tpu.memory_space<vmem>>, vector<3x1x128xf32>
    %83 = vector.shape_cast %82 : vector<3x1x128xf32> to vector<3x128xf32>
    %84 = vector.broadcast %77 : f32 to vector<3x128xf32>
    %85 = arith.mulf %83, %84 : vector<3x128xf32>
    %86 = arith.subf %81, %85 : vector<3x128xf32>
    %cst_46 = arith.constant 1.73168802 : f32
    %87 = vector.broadcast %cst_46 : f32 to vector<3x128xf32>
    %88 = arith.mulf %87, %86 : vector<3x128xf32>
    %cst_47 = arith.constant 1.74968588 : f32
    %89 = vector.broadcast %cst_47 : f32 to vector<3x128xf32>
    %90 = arith.subf %89, %88 : vector<3x128xf32>
    %cst_48 = arith.constant 0.249947637 : f32
    %91 = vector.broadcast %cst_48 : f32 to vector<3x128xf32>
    %92 = arith.divf %91, %90 : vector<3x128xf32>
    %c0_49 = arith.constant 0 : index
    %c3_50 = arith.constant 3 : index
    %c0_51 = arith.constant 0 : index
    %93 = vector.load %arg4[%c0_49, %c3_50, %c0_51] : memref<2x4x128xf32, #tpu.memory_space<vmem>>, vector<2x1x128xf32>
    %94 = vector.shape_cast %93 : vector<2x1x128xf32> to vector<2x128xf32>
    %95 = vector.shape_cast %92 : vector<3x128xf32> to vector<1x3x128xf32>
    %96 = vector.shape_cast %94 : vector<2x128xf32> to vector<2x1x128xf32>
    %97 = vector.broadcast %95 : vector<1x3x128xf32> to vector<2x3x128xf32>
    %98 = vector.broadcast %96 : vector<2x1x128xf32> to vector<2x3x128xf32>
    %99 = arith.mulf %97, %98 : vector<2x3x128xf32>
    %100 = arith.addf %75, %99 : vector<2x3x128xf32>
    %c0_52 = arith.constant 0 : index
    %c0_53 = arith.constant 0 : index
    %c0_54 = arith.constant 0 : index
    %101 = vector.load %arg7[%c0_52, %c0_53, %c0_54] : memref<2x3x128xf32, #tpu.memory_space<vmem>>, vector<2x3x128xf32>
    tpu.vector_store %arg7[%c0_52, %c0_53, %c0_54], %100 {strides = array<i32>} : memref<2x3x128xf32, #tpu.memory_space<vmem>>, vector<2x3x128xf32>,
    return
  }
  func.func @transform_0(%arg0: i32, %arg1: i32) -> i32 {
    %c0_i32 = arith.constant 0 : i32
    %c0_i32_0 = arith.constant 0 : i32
    return %c0_i32 : i32
  }
  func.func @transform_1(%arg0: i32, %arg1: i32) -> i32 {
    %c0_i32 = arith.constant 0 : i32
    %c0_i32_0 = arith.constant 0 : i32
    return %c0_i32 : i32
  }
  func.func @transform_2(%arg0: i32, %arg1: i32) -> (i32, i32, i32) {
    %c0_i32 = arith.constant 0 : i32
    %c0_i32_0 = arith.constant 0 : i32
    return %arg0, %c0_i32, %arg1 : i32, i32, i32
  }
  func.func @transform_3(%arg0: i32, %arg1: i32) -> (i32, i32, i32) {
    %c0_i32 = arith.constant 0 : i32
    %c0_i32_0 = arith.constant 0 : i32
    %c0_i32_1 = arith.constant 0 : i32
    return %c0_i32, %c0_i32_0, %arg1 : i32, i32, i32
  }
  func.func @transform_4(%arg0: i32, %arg1: i32) -> (i32, i32, i32) {
    %c0_i32 = arith.constant 0 : i32
    %c0_i32_0 = arith.constant 0 : i32
    %c0_i32_1 = arith.constant 0 : i32
    return %c0_i32, %c0_i32_0, %arg1 : i32, i32, i32
  }
  func.func @transform_5(%arg0: i32, %arg1: i32) -> (i32, i32, i32) {
    %c0_i32 = arith.constant 0 : i32
    %c0_i32_0 = arith.constant 0 : i32
    return %arg0, %c0_i32, %arg1 : i32, i32, i32
  }
}

</mosaic_0001>

<llo_original>
// kernel: mrr_weight_bank.1
$region0: #{mrr_weight_bank.1}
  #allocation0 [shape = 'u32[]', space=smem, size = 0x4, offset = 0x4, fixed_abs, tag = 'smem constant byte address 0x4 - core index']
  #allocation1 [shape = 'u32[144,128]{1,0:T(1,128)}', space=vmem, size = 0x12000, scoped, tag = 'internal scratch']
  %s0 = inlined_call_operand.vmem [shape: f32[4], index: 0, kind: input, shape index: {}]
  %s1 = inlined_call_operand.vmem [shape: f32[4], index: 1, kind: input, shape index: {}]
  %s2 = inlined_call_operand.vmem [shape: f32[2,4,128], index: 2, kind: input, shape index: {}]
  %s3 = inlined_call_operand.vmem [shape: f32[3,4,128], index: 3, kind: input, shape index: {}]
  %s4 = inlined_call_operand.vmem [shape: f32[3,4,128], index: 4, kind: input, shape index: {}]
  %s5 = inlined_call_operand.vmem [shape: f32[2,3,128], index: 5, kind: output, shape index: {}]
  %s6 = sld [smem:[#allocation0]]
  $region38: #{mrr_weight_bank.1} parent=0
    _
  %s8 = ssub.s32 1, %s6
  %s9 = scalar_select 0, %s8, %s6
  $region1: #{mrr_weight_bank.1} parent=0
    #allocation2 [shape = 'u8[512]{0}', space=smem, size = 0x200, scoped, tag = 'input window, operand 0, single buffered']
    #allocation3 [shape = 's32[1]{0}', space=sflag, size = 0x4, scoped, tag = 'scoped memory for mrr_weight_bank.1']
    #allocation4 [shape = 'u8[512]{0}', space=smem, size = 0x200, scoped, tag = 'input window, operand 1, single buffered']
    #allocation5 [shape = 's32[1]{0}', space=sflag, size = 0x4, scoped, tag = 'scoped memory for mrr_weight_bank.1']
    %10 = vsyncpa [#allocation3], 0
    %11 = vsyncpa [#allocation5], 0
    // Predicated region
    $region2: #{mrr_weight_bank.1} parent=1 // pred_check
      _
    $region3: #{mrr_weight_bank.1} parent=1 // pred_check_branch
      %13 = sbr.rel (0) target = $region5
    $region4: #{mrr_weight_bank.1} parent=1 // pred_region
      %s15 = ssub.s32 16, 16
      %16 = vsyncadd [#allocation3], %s15
      %s18 = sshll.u32 %s0, 4
      %s19 = int_to_ptr.vmem [resolvable:$true] %s18
      %21 = dma.vmem_to_smem %s19, 16, [#allocation2], [#allocation3]
    $region5: #{mrr_weight_bank.1} parent=1 // pred_fallthru
      _
    // Predicated region
    $region6: #{mrr_weight_bank.1} parent=1 // pred_check
      _
    $region7: #{mrr_weight_bank.1} parent=1 // pred_check_branch
      %23 = sbr.rel (0) target = $region9
    $region8: #{mrr_weight_bank.1} parent=1 // pred_region
      %s25 = ssub.s32 16, 16
      %26 = vsyncadd [#allocation5], %s25
      %s28 = sshll.u32 %s1, 4
      %s29 = int_to_ptr.vmem [resolvable:$true] %s28
      %31 = dma.vmem_to_smem %s29, 16, [#allocation4], [#allocation5]
    $region9: #{mrr_weight_bank.1} parent=1 // pred_fallthru
      _
    // Predicated region
    $region10: #{mrr_weight_bank.1} parent=1 // pred_check
      _
    $region11: #{mrr_weight_bank.1} parent=1 // pred_check_branch
      %33 = sbr.rel (0) target = $region13
    $region12: #{mrr_weight_bank.1} parent=1 // pred_region
      _
    $region13: #{mrr_weight_bank.1} parent=1 // pred_fallthru
      _
    // Predicated region
    $region14: #{mrr_weight_bank.1} parent=1 // pred_check
      _
    $region15: #{mrr_weight_bank.1} parent=1 // pred_check_branch
      %35 = sbr.rel (0) target = $region17
    $region16: #{mrr_weight_bank.1} parent=1 // pred_region
      _
    $region17: #{mrr_weight_bank.1} parent=1 // pred_fallthru
      _
    // Predicated region
    $region18: #{mrr_weight_bank.1} parent=1 // pred_check
      _
    $region19: #{mrr_weight_bank.1} parent=1 // pred_check_branch
      %37 = sbr.rel (0) target = $region21
    $region20: #{mrr_weight_bank.1} parent=1 // pred_region
      _
    $region21: #{mrr_weight_bank.1} parent=1 // pred_fallthru
      _
    // Predicated region
    $region22: #{mrr_weight_bank.1} parent=1 // pred_check
      _
    $region23: #{mrr_weight_bank.1} parent=1 // pred_check_branch
      %39 = sbr.rel (0) target = $region25
    $region24: #{mrr_weight_bank.1} parent=1 // pred_region
      %40 = dma.done [#allocation3], 16
    $region25: #{mrr_weight_bank.1} parent=1 // pred_fallthru
      _
    // Predicated region
    $region26: #{mrr_weight_bank.1} parent=1 // pred_check
      _
    $region27: #{mrr_weight_bank.1} parent=1 // pred_check_branch
      %42 = sbr.rel (0) target = $region29
    $region28: #{mrr_weight_bank.1} parent=1 // pred_region
      %43 = dma.done [#allocation5], 16
    $region29: #{mrr_weight_bank.1} parent=1 // pred_fallthru
      _
    %44 = sfence
    %s45 = sld [smem:[#allocation2]]
    %s46 = sld [smem:[#allocation4]]
    %v47 = vld [vmem:[%s3] sm:$0x1]
    %v48 = vld [vmem:[%s3 + $0x4] sm:$0x1]
    %v49 = vld [vmem:[%s3 + $0x8] sm:$0x1]
    %v50 = vstv %s45
    %v51 = vmul.f32 %v47, %v50
    %v52 = vmul.f32 %v48, %v50
    %v53 = vmul.f32 %v49, %v50
    %v54 = vld [vmem:[%s4] sm:$0x1]
    %v55 = vld [vmem:[%s4 + $0x4] sm:$0x1]
    %v56 = vld [vmem:[%s4 + $0x8] sm:$0x1]
    %v57 = vstv %s46
    %v58 = vmul.f32 %v54, %v57
    %v59 = vmul.f32 %v55, %v57
    %v60 = vmul.f32 %v56, %v57
    %v61 = vsub.f32 %v51, %v58
    %v62 = vsub.f32 %v52, %v59
    %v63 = vsub.f32 %v53, %v60
    %v64 = vmul.f32 %v61, 1.731688
    %v65 = vmul.f32 %v62, 1.731688
    %v66 = vmul.f32 %v63, 1.731688
    %v67 = vsub.f32 1.7496859, %v64
    %v68 = vsub.f32 1.7496859, %v65
    %v69 = vsub.f32 1.7496859, %v66
    %v70 = vrcp.pop %v67
    %v71 = vmul.f32 0.24994764, %v70
    %v72 = vrcp.pop %v68
    %v73 = vmul.f32 0.24994764, %v72
    %v74 = vrcp.pop %v69
    %v75 = vmul.f32 0.24994764, %v74
    %v76 = vld [vmem:[%s2] sm:$0x1]
    %v77 = vld [vmem:[%s2 + $0x4] sm:$0x1]
    %v78 = vlaneseq
    %v79 = vshrl.u32 %v78, 7
    %v80 = vsub.s32 0, %v79
    %v81 = vrot.slane %v76, %v80
    %v82 = vlaneseq
    %v83 = vshrl.u32 %v82, 7
    %v84 = vsub.s32 0, %v83
    %v85 = vrot.slane %v77, %v84
    %v86 = vmul.f32 %v71, %v81
    %v87 = vmul.f32 %v73, %v81
    %v88 = vmul.f32 %v75, %v81
    %v89 = vmul.f32 %v71, %v85
    %v90 = vmul.f32 %v73, %v85
    %v91 = vmul.f32 %v75, %v85
    %v92 = vadd.f32 %v86, 0.0
    %v93 = vadd.f32 %v87, 0.0
    %v94 = vadd.f32 %v88, 0.0
    %v95 = vadd.f32 %v89, 0.0
    %v96 = vadd.f32 %v90, 0.0
    %v97 = vadd.f32 %v91, 0.0
    %s98 = sld [smem:[#allocation2 + $0x1]]
    %s99 = sld [smem:[#allocation4 + $0x1]]
    %v100 = vld [vmem:[%s3 + $0x1] sm:$0x1]
    %v101 = vld [vmem:[%s3 + $0x5] sm:$0x1]
    %v102 = vld [vmem:[%s3 + $0x9] sm:$0x1]
    %v103 = vstv %s98
    %v104 = vmul.f32 %v100, %v103
    %v105 = vmul.f32 %v101, %v103
    %v106 = vmul.f32 %v102, %v103
    %v107 = vld [vmem:[%s4 + $0x1] sm:$0x1]
    %v108 = vld [vmem:[%s4 + $0x5] sm:$0x1]
    %v109 = vld [vmem:[%s4 + $0x9] sm:$0x1]
    %v110 = vstv %s99
    %v111 = vmul.f32 %v107, %v110
    %v112 = vmul.f32 %v108, %v110
    %v113 = vmul.f32 %v109, %v110
    %v114 = vsub.f32 %v104, %v111
    %v115 = vsub.f32 %v105, %v112
    %v116 = vsub.f32 %v106, %v113
    %v117 = vmul.f32 %v114, 1.731688
    %v118 = vmul.f32 %v115, 1.731688
    %v119 = vmul.f32 %v116, 1.731688
    %v120 = vsub.f32 1.7496859, %v117
    %v121 = vsub.f32 1.7496859, %v118
    %v122 = vsub.f32 1.7496859, %v119
    %v123 = vrcp.pop %v120
    %v124 = vmul.f32 0.24994764, %v123
    %v125 = vrcp.pop %v121
    %v126 = vmul.f32 0.24994764, %v125
    %v127 = vrcp.pop %v122
    %v128 = vmul.f32 0.24994764, %v127
    %v129 = vld [vmem:[%s2 + $0x1] sm:$0x1]
    %v130 = vld [vmem:[%s2 + $0x5] sm:$0x1]
    %v131 = vlaneseq
    %v132 = vshrl.u32 %v131, 7
    %v133 = vsub.s32 0, %v132
    %v134 = vrot.slane %v129, %v133
    %v135 = vlaneseq
    %v136 = vshrl.u32 %v135, 7
    %v137 = vsub.s32 0, %v136
    %v138 = vrot.slane %v130, %v137
    %v139 = vmul.f32 %v124, %v134
    %v140 = vmul.f32 %v126, %v134
    %v141 = vmul.f32 %v128, %v134
    %v142 = vmul.f32 %v124, %v138
    %v143 = vmul.f32 %v126, %v138
    %v144 = vmul.f32 %v128, %v138
    %v145 = vadd.f32 %v92, %v139
    %v146 = vadd.f32 %v93, %v140
    %v147 = vadd.f32 %v94, %v141
    %v148 = vadd.f32 %v95, %v142
    %v149 = vadd.f32 %v96, %v143
    %v150 = vadd.f32 %v97, %v144
    %s151 = sld [smem:[#allocation2 + $0x2]]
    %s152 = sld [smem:[#allocation4 + $0x2]]
    %v153 = vld [vmem:[%s3 + $0x2] sm:$0x1]
    %v154 = vld [vmem:[%s3 + $0x6] sm:$0x1]
    %v155 = vld [vmem:[%s3 + $0xa] sm:$0x1]
    %v156 = vstv %s151
    %v157 = vmul.f32 %v153, %v156
    %v158 = vmul.f32 %v154, %v156
    %v159 = vmul.f32 %v155, %v156
    %v160 = vld [vmem:[%s4 + $0x2] sm:$0x1]
    %v161 = vld [vmem:[%s4 + $0x6] sm:$0x1]
    %v162 = vld [vmem:[%s4 + $0xa] sm:$0x1]
    %v163 = vstv %s152
    %v164 = vmul.f32 %v160, %v163
    %v165 = vmul.f32 %v161, %v163
    %v166 = vmul.f32 %v162, %v163
    %v167 = vsub.f32 %v157, %v164
    %v168 = vsub.f32 %v158, %v165
    %v169 = vsub.f32 %v159, %v166
    %v170 = vmul.f32 %v167, 1.731688
    %v171 = vmul.f32 %v168, 1.731688
    %v172 = vmul.f32 %v169, 1.731688
    %v173 = vsub.f32 1.7496859, %v170
    %v174 = vsub.f32 1.7496859, %v171
    %v175 = vsub.f32 1.7496859, %v172
    %v176 = vrcp.pop %v173
    %v177 = vmul.f32 0.24994764, %v176
    %v178 = vrcp.pop %v174
    %v179 = vmul.f32 0.24994764, %v178
    %v180 = vrcp.pop %v175
    %v181 = vmul.f32 0.24994764, %v180
    %v182 = vld [vmem:[%s2 + $0x2] sm:$0x1]
    %v183 = vld [vmem:[%s2 + $0x6] sm:$0x1]
    %v184 = vlaneseq
    %v185 = vshrl.u32 %v184, 7
    %v186 = vsub.s32 0, %v185
    %v187 = vrot.slane %v182, %v186
    %v188 = vlaneseq
    %v189 = vshrl.u32 %v188, 7
    %v190 = vsub.s32 0, %v189
    %v191 = vrot.slane %v183, %v190
    %v192 = vmul.f32 %v177, %v187
    %v193 = vmul.f32 %v179, %v187
    %v194 = vmul.f32 %v181, %v187
    %v195 = vmul.f32 %v177, %v191
    %v196 = vmul.f32 %v179, %v191
    %v197 = vmul.f32 %v181, %v191
    %v198 = vadd.f32 %v145, %v192
    %v199 = vadd.f32 %v146, %v193
    %v200 = vadd.f32 %v147, %v194
    %v201 = vadd.f32 %v148, %v195
    %v202 = vadd.f32 %v149, %v196
    %v203 = vadd.f32 %v150, %v197
    %s204 = sld [smem:[#allocation2 + $0x3]]
    %s205 = sld [smem:[#allocation4 + $0x3]]
    %v206 = vld [vmem:[%s3 + $0x3] sm:$0x1]
    %v207 = vld [vmem:[%s3 + $0x7] sm:$0x1]
    %v208 = vld [vmem:[%s3 + $0xb] sm:$0x1]
    %v209 = vstv %s204
    %v210 = vmul.f32 %v206, %v209
    %v211 = vmul.f32 %v207, %v209
    %v212 = vmul.f32 %v208, %v209
    %v213 = vld [vmem:[%s4 + $0x3] sm:$0x1]
    %v214 = vld [vmem:[%s4 + $0x7] sm:$0x1]
    %v215 = vld [vmem:[%s4 + $0xb] sm:$0x1]
    %v216 = vstv %s205
    %v217 = vmul.f32 %v213, %v216
    %v218 = vmul.f32 %v214, %v216
    %v219 = vmul.f32 %v215, %v216
    %v220 = vsub.f32 %v210, %v217
    %v221 = vsub.f32 %v211, %v218
    %v222 = vsub.f32 %v212, %v219
    %v223 = vmul.f32 %v220, 1.731688
    %v224 = vmul.f32 %v221, 1.731688
    %v225 = vmul.f32 %v222, 1.731688
    %v226 = vsub.f32 1.7496859, %v223
    %v227 = vsub.f32 1.7496859, %v224
    %v228 = vsub.f32 1.7496859, %v225
    %v229 = vrcp.pop %v226
    %v230 = vmul.f32 0.24994764, %v229
    %v231 = vrcp.pop %v227
    %v232 = vmul.f32 0.24994764, %v231
    %v233 = vrcp.pop %v228
    %v234 = vmul.f32 0.24994764, %v233
    %v235 = vld [vmem:[%s2 + $0x3] sm:$0x1]
    %v236 = vld [vmem:[%s2 + $0x7] sm:$0x1]
    %v237 = vlaneseq
    %v238 = vshrl.u32 %v237, 7
    %v239 = vsub.s32 0, %v238
    %v240 = vrot.slane %v235, %v239
    %v241 = vlaneseq
    %v242 = vshrl.u32 %v241, 7
    %v243 = vsub.s32 0, %v242
    %v244 = vrot.slane %v236, %v243
    %v245 = vmul.f32 %v230, %v240
    %v246 = vmul.f32 %v232, %v240
    %v247 = vmul.f32 %v234, %v240
    %v248 = vmul.f32 %v230, %v244
    %v249 = vmul.f32 %v232, %v244
    %v250 = vmul.f32 %v234, %v244
    %v251 = vadd.f32 %v198, %v245
    %v252 = vadd.f32 %v199, %v246
    %v253 = vadd.f32 %v200, %v247
    %v254 = vadd.f32 %v201, %v248
    %v255 = vadd.f32 %v202, %v249
    %v256 = vadd.f32 %v203, %v250
    %v263 = vrot.slane %v252, 7
    %vm264 = vcmask 1041409
    %v265 = vsel %vm264, %v263, %v251
    %v266 = vrot.slane %v253, 6
    %vm267 = vcmask 1042434
    %v268 = vsel %vm267, %v266, %v265
    %v269 = vrot.slane %v255, 7
    %v270 = vsel %vm264, %v269, %v254
    %v271 = vrot.slane %v256, 6
    %v272 = vsel %vm267, %v271, %v270
    %275 = vst [vmem:[%s5] sm:$0x7] %v268
    %276 = vst [vmem:[%s5 + $0x4] sm:$0x7] %v272
    // Predicated region
    $region30: #{mrr_weight_bank.1} parent=1 // pred_check
      _
    $region31: #{mrr_weight_bank.1} parent=1 // pred_check_branch
      %278 = sbr.rel (0) target = $region33
    $region32: #{mrr_weight_bank.1} parent=1 // pred_region
      _
    $region33: #{mrr_weight_bank.1} parent=1 // pred_fallthru
      _
    // Predicated region
    $region34: #{mrr_weight_bank.1} parent=1 // pred_check
      _
    $region35: #{mrr_weight_bank.1} parent=1 // pred_check_branch
      %280 = sbr.rel (0) target = $region37
    $region36: #{mrr_weight_bank.1} parent=1 // pred_region
      _
    $region37: #{mrr_weight_bank.1} parent=1 // pred_fallthru
      _
    %281 = vsyncpa [#allocation3], 1
    %282 = vsyncpa [#allocation5], 1

</llo_original>
